<compile_context>
chip_gen: v7x
topology: tpu7x:2x2x1
jax: 0.10.0
libtpu: 0.0.40
codegen_flags: <defaults>
</compile_context>

<pallas_src>
import jax
import jax.numpy as jnp
from jax.experimental import pallas as pl
from jax.experimental.pallas import tpu as pltpu

LINEAR_CRITIC_Q1 = [256, 256]
LINEAR_CRITIC_Q2 = [256, 256]
H = LINEAR_CRITIC_Q1[0]  # 256 hidden units per head


def _round_up(x, m):
    return -(-x // m) * m


def _critic_kernel(sa_ref, w1_ref, b1_ref, w12_ref, b12_ref,
                   w22_ref, b22_ref, w3_ref, b3_ref, q1_ref, q2_ref):
    # ---- fused layer 1 of both heads: single K=d_in MXU pass, N=512.
    h = jnp.maximum(
        jnp.dot(sa_ref[...], w1_ref[...], preferred_element_type=jnp.float32)
        + b1_ref[...], 0.0)                              # (TB, 512) f32

    h1 = h[:, :H].astype(jnp.bfloat16)                   # 128-lane aligned
    h2 = h[:, H:].astype(jnp.bfloat16)

    # ---- per-head layer 2 (MXU, f32 accumulate).
    g1 = jnp.maximum(
        jnp.dot(h1, w12_ref[...], preferred_element_type=jnp.float32)
        + b12_ref[...], 0.0)                             # (TB, 256) f32
    g2 = jnp.maximum(
        jnp.dot(h2, w22_ref[...], preferred_element_type=jnp.float32)
        + b22_ref[...], 0.0)

    # ---- output heads on VPU (broadcast multiply) + XLU (lane reduce).
    # w3 is (2, 256) f32: row 0 = l1_3 weights, row 1 = l2_3 weights.
    w3 = w3_ref[...]
    q1 = jnp.sum(g1 * w3[0:1, :], axis=-1, keepdims=True) + b3_ref[:, 0:1]
    q2 = jnp.sum(g2 * w3[1:2, :], axis=-1, keepdims=True) + b3_ref[:, 1:2]
    q1_ref[...] = q1.astype(q1_ref.dtype)
    q2_ref[...] = q2.astype(q2_ref.dtype)


def critic_forward(state, action, params, *, batch_tile=1024):
    """Equivalent of Critic.forward(state, action) -> (q1, q2)."""
    B, state_dim = state.shape
    action_dim = action.shape[1]
    d_in = state_dim + action_dim

    # Concat once in the wrapper and feed bf16 activations (halves input DMA,
    # removes in-kernel casts and the second layer-1 dot).
    sa = jnp.concatenate([state, action], axis=1).astype(jnp.bfloat16)

    # Batch tiling: one step for small B; otherwise an even number of steps so
    # the "parallel" grid axis splits evenly across v7x's two TensorCores.
    if B <= batch_tile:
        steps = 1
        TB = max(8, _round_up(B, 8))
    else:
        steps = pl.cdiv(B, batch_tile)
        if steps % 2:
            steps += 1
        TB = _round_up(pl.cdiv(B, steps), 8)
    Bp = TB * steps
    if Bp != B:
        # Padded rows compute relu(bias) garbage that is sliced off below;
        # safe because nothing reduces over the batch axis inside the kernel.
        sa = jnp.pad(sa, ((0, Bp - B), (0, 0)))

    grid = (steps,)

    def batch_map(i):
        return (i, 0)

    def const_map(i):
        return (0, 0)

    weight_names = ("w1", "b1", "w12", "b12", "w22", "b22", "w3", "b3")
    weights = [params[n] for n in weight_names]

    in_specs = ([pl.BlockSpec((TB, d_in), batch_map)]
                + [pl.BlockSpec(w.shape, const_map) for w in weights])
    out_specs = [pl.BlockSpec((TB, 1), batch_map),
                 pl.BlockSpec((TB, 1), batch_map)]

    flops = 2 * Bp * (d_in * 2 * H + 2 * H * H + 2 * H)
    bytes_accessed = (sum(int(w.size) * w.dtype.itemsize for w in weights)
                      + int(sa.size) * sa.dtype.itemsize
                      + Bp * 2 * 4)

    q1, q2 = pl.pallas_call(
        _critic_kernel,
        out_shape=(jax.ShapeDtypeStruct((Bp, 1), jnp.float32),
                   jax.ShapeDtypeStruct((Bp, 1), jnp.float32)),
        grid=grid,
        in_specs=in_specs,
        out_specs=out_specs,
        compiler_params=pltpu.CompilerParams(
            dimension_semantics=("parallel",)),
        cost_estimate=pl.CostEstimate(
            flops=flops, transcendentals=0, bytes_accessed=bytes_accessed),
    )(sa, *weights)

    return q1[:B], q2[:B]


def init_critic_params(key, state_dim, action_dim):
    """nn.Linear-style U(-1/sqrt(fan_in), 1/sqrt(fan_in)) init, packed for the
    fused kernel layout.  Matmul weights are (in, out) bf16 (deliberate:
    halves weight DMA, native MXU path, ~1e-3 rel error vs the f32 PyTorch
    reference); output-head weights and all biases stay f32."""
    def linear(k, fan_in, fan_out):
        kw, kb = jax.random.split(k)
        bound = 1.0 / (fan_in ** 0.5)
        w = jax.random.uniform(kw, (fan_in, fan_out), jnp.float32, -bound, bound)
        b = jax.random.uniform(kb, (1, fan_out), jnp.float32, -bound, bound)
        return w, b

    d_in = state_dim + action_dim
    keys = jax.random.split(key, 6)
    w11, b11 = linear(keys[0], d_in, H)   # l1_1
    w12, b12 = linear(keys[1], H, H)      # l1_2
    w13, b13 = linear(keys[2], H, 1)      # l1_3
    w21, b21 = linear(keys[3], d_in, H)   # l2_1
    w22, b22 = linear(keys[4], H, H)      # l2_2
    w23, b23 = linear(keys[5], H, 1)      # l2_3

    # Fuse both heads' first layer: [W1_q1 | W1_q2] -> (d_in, 512).
    w1 = jnp.concatenate([w11, w21], axis=1)
    b1 = jnp.concatenate([b11, b21], axis=1)          # (1, 512)

    # Output heads as weight rows for the VPU/XLU path: (2, 256) f32.
    w3 = jnp.concatenate([w13.T, w23.T], axis=0)      # row0=q1, row1=q2
    b3 = jnp.concatenate([b13, b23], axis=1)          # (1, 2)

    bf16 = lambda x: x.astype(jnp.bfloat16)
    return dict(
        w1=bf16(w1), b1=b1,
        w12=bf16(w12), b12=b12,
        w22=bf16(w22), b22=b22,
        w3=w3, b3=b3,
    )


def critic_reference(state, action, p):
    """Pure-JAX reference using the same bf16 weights / f32 accumulation."""
    sa = jnp.concatenate([state, action], axis=1).astype(jnp.bfloat16)
    h = jnp.maximum(
        jnp.dot(sa, p["w1"], preferred_element_type=jnp.float32) + p["b1"], 0.0)
    h1 = h[:, :H].astype(jnp.bfloat16)
    h2 = h[:, H:].astype(jnp.bfloat16)
    g1 = jnp.maximum(
        jnp.dot(h1, p["w12"], preferred_element_type=jnp.float32) + p["b12"], 0.0)
    g2 = jnp.maximum(
        jnp.dot(h2, p["w22"], preferred_element_type=jnp.float32) + p["b22"], 0.0)
    q1 = jnp.sum(g1 * p["w3"][0:1, :], axis=-1, keepdims=True) + p["b3"][:, 0:1]
    q2 = jnp.sum(g2 * p["w3"][1:2, :], axis=-1, keepdims=True) + p["b3"][:, 1:2]
    return q1, q2


if __name__ == "__main__":
    # Walker-style dims: state_dim=17, action_dim=6.
    state_dim, action_dim = 17, 6

    key = jax.random.PRNGKey(0)
    kp, ks, ka = jax.random.split(key, 3)
    params = init_critic_params(kp, state_dim, action_dim)

    # Small inference-style batch (single grid step).
    batch = 8
    state = jax.random.normal(ks, (batch, state_dim), jnp.float32)
    action = jax.random.normal(ka, (batch, action_dim), jnp.float32)

    q1, q2 = jax.block_until_ready(critic_forward(state, action, params))
    q1_ref, q2_ref = critic_reference(state, action, params)
    assert q1.shape == (batch, 1) and q2.shape == (batch, 1)
    assert jnp.allclose(q1, q1_ref, atol=2e-3, rtol=2e-3)
    assert jnp.allclose(q2, q2_ref, atol=2e-3, rtol=2e-3)

    # Training-style batch exercising the multi-step grid, padding, and the
    # even-step (v7x two-TensorCore) balancing path: 600 rows @ tile 256 ->
    # 4 steps of 152 rows.
    big = 600
    ks2, ka2 = jax.random.split(jax.random.PRNGKey(1))
    state_b = jax.random.normal(ks2, (big, state_dim), jnp.float32)
    action_b = jax.random.normal(ka2, (big, action_dim), jnp.float32)
    q1b, q2b = jax.block_until_ready(
        critic_forward(state_b, action_b, params, batch_tile=256))
    q1b_ref, q2b_ref = critic_reference(state_b, action_b, params)
    assert q1b.shape == (big, 1) and q2b.shape == (big, 1)
    assert jnp.allclose(q1b, q1b_ref, atol=2e-3, rtol=2e-3)
    assert jnp.allclose(q2b, q2b_ref, atol=2e-3, rtol=2e-3)

    print("KERNEL_OK")
</pallas_src>

<mosaic_0001>
module attributes {stable_mosaic.version = 11 : i64} {
  func.func @_critic_kernel(%arg0: i32, %arg1: memref<8x23xbf16, #tpu.memory_space<vmem>>, %arg2: memref<23x512xbf16, #tpu.memory_space<vmem>>, %arg3: memref<1x512xf32, #tpu.memory_space<vmem>>, %arg4: memref<256x256xbf16, #tpu.memory_space<vmem>>, %arg5: memref<1x256xf32, #tpu.memory_space<vmem>>, %arg6: memref<256x256xbf16, #tpu.memory_space<vmem>>, %arg7: memref<1x256xf32, #tpu.memory_space<vmem>>, %arg8: memref<2x256xf32, #tpu.memory_space<vmem>>, %arg9: memref<1x2xf32, #tpu.memory_space<vmem>>, %arg10: memref<8x1xf32, #tpu.memory_space<vmem>>, %arg11: memref<8x1xf32, #tpu.memory_space<vmem>>) attributes {dimension_semantics = [#tpu.dimension_semantics<parallel>], iteration_bounds = array<i64: 1>, scalar_prefetch = 0 : i64, scratch_operands = 0 : i64, tpu.core_type = #tpu.core_type<tc>, window_params = [{transform_indices = @transform_0, window_bounds = array<i64: 8, 23>}, {pipeline_mode = #tpu.pipeline_mode<synchronous>, transform_indices = @transform_1, window_bounds = array<i64: 23, 512>}, {pipeline_mode = #tpu.pipeline_mode<synchronous>, transform_indices = @transform_2, window_bounds = array<i64: 1, 512>}, {pipeline_mode = #tpu.pipeline_mode<synchronous>, transform_indices = @transform_3, window_bounds = array<i64: 256, 256>}, {pipeline_mode = #tpu.pipeline_mode<synchronous>, transform_indices = @transform_4, window_bounds = array<i64: 1, 256>}, {pipeline_mode = #tpu.pipeline_mode<synchronous>, transform_indices = @transform_5, window_bounds = array<i64: 256, 256>}, {pipeline_mode = #tpu.pipeline_mode<synchronous>, transform_indices = @transform_6, window_bounds = array<i64: 1, 256>}, {pipeline_mode = #tpu.pipeline_mode<synchronous>, transform_indices = @transform_7, window_bounds = array<i64: 2, 256>}, {pipeline_mode = #tpu.pipeline_mode<synchronous>, transform_indices = @transform_8, window_bounds = array<i64: 1, 2>}, {transform_indices = @transform_9, window_bounds = array<i64: 8, 1>}, {transform_indices = @transform_10, window_bounds = array<i64: 8, 1>}]} {
    %c0 = arith.constant 0 : index
    %c0_0 = arith.constant 0 : index
    %0 = vector.load %arg1[%c0, %c0_0] : memref<8x23xbf16, #tpu.memory_space<vmem>>, vector<8x23xbf16>
    %c0_1 = arith.constant 0 : index
    %c0_2 = arith.constant 0 : index
    %1 = vector.load %arg2[%c0_1, %c0_2] : memref<23x512xbf16, #tpu.memory_space<vmem>>, vector<23x512xbf16>
    %cst = arith.constant dense<0.000000e+00> : vector<8x512xf32>
    %2 = tpu.matmul %0, %1, %cst {dimension_numbers = #tpu.dot_dimension_numbers<[1], [0], [0], [1], [0, 0, 1, 1], [], []>} : vector<8x23xbf16>, vector<23x512xbf16>, vector<8x512xf32> -> vector<8x512xf32>
    %c0_3 = arith.constant 0 : index
    %c0_4 = arith.constant 0 : index
    %3 = vector.load %arg3[%c0_3, %c0_4] : memref<1x512xf32, #tpu.memory_space<vmem>>, vector<1x512xf32>
    %4 = vector.broadcast %3 : vector<1x512xf32> to vector<8x512xf32>
    %5 = arith.addf %2, %4 : vector<8x512xf32>
    %cst_5 = arith.constant 0.000000e+00 : f32
    %6 = vector.broadcast %cst_5 : f32 to vector<8x512xf32>
    %7 = arith.maximumf %5, %6 : vector<8x512xf32>
    %8 = vector.extract_strided_slice %7 {offsets = [0, 0], sizes = [8, 256], strides = [1, 1]} : vector<8x512xf32> to vector<8x256xf32>
    %9 = arith.truncf %8 : vector<8x256xf32> to vector<8x256xbf16>
    %10 = vector.extract_strided_slice %7 {offsets = [0, 256], sizes = [8, 256], strides = [1, 1]} : vector<8x512xf32> to vector<8x256xf32>
    %11 = arith.truncf %10 : vector<8x256xf32> to vector<8x256xbf16>
    %c0_6 = arith.constant 0 : index
    %c0_7 = arith.constant 0 : index
    %12 = vector.load %arg4[%c0_6, %c0_7] : memref<256x256xbf16, #tpu.memory_space<vmem>>, vector<256x256xbf16>
    %cst_8 = arith.constant dense<0.000000e+00> : vector<8x256xf32>
    %13 = tpu.matmul %9, %12, %cst_8 {dimension_numbers = #tpu.dot_dimension_numbers<[1], [0], [0], [1], [0, 0, 1, 1], [], []>} : vector<8x256xbf16>, vector<256x256xbf16>, vector<8x256xf32> -> vector<8x256xf32>
    %c0_9 = arith.constant 0 : index
    %c0_10 = arith.constant 0 : index
    %14 = vector.load %arg5[%c0_9, %c0_10] : memref<1x256xf32, #tpu.memory_space<vmem>>, vector<1x256xf32>
    %15 = vector.broadcast %14 : vector<1x256xf32> to vector<8x256xf32>
    %16 = arith.addf %13, %15 : vector<8x256xf32>
    %cst_11 = arith.constant 0.000000e+00 : f32
    %17 = vector.broadcast %cst_11 : f32 to vector<8x256xf32>
    %18 = arith.maximumf %16, %17 : vector<8x256xf32>
    %c0_12 = arith.constant 0 : index
    %c0_13 = arith.constant 0 : index
    %19 = vector.load %arg6[%c0_12, %c0_13] : memref<256x256xbf16, #tpu.memory_space<vmem>>, vector<256x256xbf16>
    %cst_14 = arith.constant dense<0.000000e+00> : vector<8x256xf32>
    %20 = tpu.matmul %11, %19, %cst_14 {dimension_numbers = #tpu.dot_dimension_numbers<[1], [0], [0], [1], [0, 0, 1, 1], [], []>} : vector<8x256xbf16>, vector<256x256xbf16>, vector<8x256xf32> -> vector<8x256xf32>
    %c0_15 = arith.constant 0 : index
    %c0_16 = arith.constant 0 : index
    %21 = vector.load %arg7[%c0_15, %c0_16] : memref<1x256xf32, #tpu.memory_space<vmem>>, vector<1x256xf32>
    %22 = vector.broadcast %21 : vector<1x256xf32> to vector<8x256xf32>
    %23 = arith.addf %20, %22 : vector<8x256xf32>
    %cst_17 = arith.constant 0.000000e+00 : f32
    %24 = vector.broadcast %cst_17 : f32 to vector<8x256xf32>
    %25 = arith.maximumf %23, %24 : vector<8x256xf32>
    %c0_18 = arith.constant 0 : index
    %c0_19 = arith.constant 0 : index
    %26 = vector.load %arg8[%c0_18, %c0_19] : memref<2x256xf32, #tpu.memory_space<vmem>>, vector<2x256xf32>
    %27 = vector.extract_strided_slice %26 {offsets = [0, 0], sizes = [1, 256], strides = [1, 1]} : vector<2x256xf32> to vector<1x256xf32>
    %28 = vector.broadcast %27 : vector<1x256xf32> to vector<8x256xf32>
    %29 = arith.mulf %18, %28 : vector<8x256xf32>
    %cst_20 = arith.constant dense<0.000000e+00> : vector<8xf32>
    %30 = vector.multi_reduction <add>, %29, %cst_20 [1] : vector<8x256xf32> to vector<8xf32>
    %31 = vector.shape_cast %30 : vector<8xf32> to vector<8x1xf32>
    %c0_21 = arith.constant 0 : index
    %c0_22 = arith.constant 0 : index
    %32 = vector.load %arg9[%c0_21, %c0_22] : memref<1x2xf32, #tpu.memory_space<vmem>>, vector<1x1xf32>
    %33 = vector.broadcast %32 : vector<1x1xf32> to vector<8x1xf32>
    %34 = arith.addf %31, %33 : vector<8x1xf32>
    %35 = vector.extract_strided_slice %26 {offsets = [1, 0], sizes = [1, 256], strides = [1, 1]} : vector<2x256xf32> to vector<1x256xf32>
    %36 = vector.broadcast %35 : vector<1x256xf32> to vector<8x256xf32>
    %37 = arith.mulf %25, %36 : vector<8x256xf32>
    %cst_23 = arith.constant dense<0.000000e+00> : vector<8xf32>
    %38 = vector.multi_reduction <add>, %37, %cst_23 [1] : vector<8x256xf32> to vector<8xf32>
    %39 = vector.shape_cast %38 : vector<8xf32> to vector<8x1xf32>
    %c0_24 = arith.constant 0 : index
    %c1 = arith.constant 1 : index
    %40 = vector.load %arg9[%c0_24, %c1] : memref<1x2xf32, #tpu.memory_space<vmem>>, vector<1x1xf32>
    %41 = vector.broadcast %40 : vector<1x1xf32> to vector<8x1xf32>
    %42 = arith.addf %39, %41 : vector<8x1xf32>
    %c0_25 = arith.constant 0 : index
    %c0_26 = arith.constant 0 : index
    %43 = vector.load %arg10[%c0_25, %c0_26] : memref<8x1xf32, #tpu.memory_space<vmem>>, vector<8x1xf32>
    tpu.vector_store %arg10[%c0_25, %c0_26], %34 {strides = array<i32>} : memref<8x1xf32, #tpu.memory_space<vmem>>, vector<8x1xf32>,
    %c0_27 = arith.constant 0 : index
    %c0_28 = arith.constant 0 : index
    %44 = vector.load %arg11[%c0_27, %c0_28] : memref<8x1xf32, #tpu.memory_space<vmem>>, vector<8x1xf32>
    tpu.vector_store %arg11[%c0_27, %c0_28], %42 {strides = array<i32>} : memref<8x1xf32, #tpu.memory_space<vmem>>, vector<8x1xf32>,
    return
  }
  func.func @transform_0(%arg0: i32) -> (i32, i32) {
    %c0_i32 = arith.constant 0 : i32
    %c0_i32_0 = arith.constant 0 : i32
    return %arg0, %c0_i32 : i32, i32
  }
  func.func @transform_1(%arg0: i32) -> (i32, i32) {
    %c0_i32 = arith.constant 0 : i32
    %c0_i32_0 = arith.constant 0 : i32
    %c0_i32_1 = arith.constant 0 : i32
    return %c0_i32, %c0_i32_0 : i32, i32
  }
  func.func @transform_2(%arg0: i32) -> (i32, i32) {
    %c0_i32 = arith.constant 0 : i32
    %c0_i32_0 = arith.constant 0 : i32
    %c0_i32_1 = arith.constant 0 : i32
    return %c0_i32, %c0_i32_0 : i32, i32
  }
  func.func @transform_3(%arg0: i32) -> (i32, i32) {
    %c0_i32 = arith.constant 0 : i32
    %c0_i32_0 = arith.constant 0 : i32
    %c0_i32_1 = arith.constant 0 : i32
    return %c0_i32, %c0_i32_0 : i32, i32
  }
  func.func @transform_4(%arg0: i32) -> (i32, i32) {
    %c0_i32 = arith.constant 0 : i32
    %c0_i32_0 = arith.constant 0 : i32
    %c0_i32_1 = arith.constant 0 : i32
    return %c0_i32, %c0_i32_0 : i32, i32
  }
  func.func @transform_5(%arg0: i32) -> (i32, i32) {
    %c0_i32 = arith.constant 0 : i32
    %c0_i32_0 = arith.constant 0 : i32
    %c0_i32_1 = arith.constant 0 : i32
    return %c0_i32, %c0_i32_0 : i32, i32
  }
  func.func @transform_6(%arg0: i32) -> (i32, i32) {
    %c0_i32 = arith.constant 0 : i32
    %c0_i32_0 = arith.constant 0 : i32
    %c0_i32_1 = arith.constant 0 : i32
    return %c0_i32, %c0_i32_0 : i32, i32
  }
  func.func @transform_7(%arg0: i32) -> (i32, i32) {
    %c0_i32 = arith.constant 0 : i32
    %c0_i32_0 = arith.constant 0 : i32
    %c0_i32_1 = arith.constant 0 : i32
    return %c0_i32, %c0_i32_0 : i32, i32
  }
  func.func @transform_8(%arg0: i32) -> (i32, i32) {
    %c0_i32 = arith.constant 0 : i32
    %c0_i32_0 = arith.constant 0 : i32
    %c0_i32_1 = arith.constant 0 : i32
    return %c0_i32, %c0_i32_0 : i32, i32
  }
  func.func @transform_9(%arg0: i32) -> (i32, i32) {
    %c0_i32 = arith.constant 0 : i32
    %c0_i32_0 = arith.constant 0 : i32
    return %arg0, %c0_i32 : i32, i32
  }
  func.func @transform_10(%arg0: i32) -> (i32, i32) {
    %c0_i32 = arith.constant 0 : i32
    %c0_i32_0 = arith.constant 0 : i32
    return %arg0, %c0_i32 : i32, i32
  }
}

</mosaic_0001>

<llo_original>
// kernel: tpu_custom_call.1
$region0: #{tpu_custom_call.1}
  #allocation0 [shape = 'u32[]', space=smem, size = 0x4, offset = 0x4, fixed_abs, tag = 'smem constant byte address 0x4 - core index']
  #allocation1 [shape = 'u32[144,128]{1,0:T(1,128)}', space=vmem, size = 0x12000, scoped, tag = 'internal scratch']
  %s0 = inlined_call_operand.hbm [shape: bf16[8,23], index: 0, kind: input, shape index: {}]
  %s1 = inlined_call_operand.hbm [shape: bf16[23,512], index: 1, kind: input, shape index: {}]
  %s2 = inlined_call_operand.vmem [shape: f32[1,512], index: 2, kind: input, shape index: {}]
  %s3 = inlined_call_operand.hbm [shape: bf16[256,256], index: 3, kind: input, shape index: {}]
  %s4 = inlined_call_operand.vmem [shape: f32[1,256], index: 4, kind: input, shape index: {}]
  %s5 = inlined_call_operand.hbm [shape: bf16[256,256], index: 5, kind: input, shape index: {}]
  %s6 = inlined_call_operand.vmem [shape: f32[1,256], index: 6, kind: input, shape index: {}]
  %s7 = inlined_call_operand.vmem [shape: f32[2,256], index: 7, kind: input, shape index: {}]
  %s8 = inlined_call_operand.vmem [shape: f32[1,2], index: 8, kind: input, shape index: {}]
  %s9 = inlined_call_operand.vmem [shape: f32[8,1], index: 9, kind: output, shape index: {0}]
  %s10 = inlined_call_operand.vmem [shape: f32[8,1], index: 10, kind: output, shape index: {1}]
  %11 = xla_tuple %s9, %s10
  %s12 = sld [smem:[#allocation0]]
  $region70: #{tpu_custom_call.1} parent=0
    _
  %s14 = ssub.s32 1, %s12
  %s15 = scalar_select 0, %s14, %s12
  $region1: #{tpu_custom_call.1} parent=0
    #allocation2 [shape = 'u8[2048]{0}', space=vmem, size = 0x800, scoped, tag = 'input window, operand 0, single buffered']
    #allocation3 [shape = 's32[1]{0}', space=sflag, size = 0x4, scoped, tag = 'scoped memory for tpu_custom_call.1']
    #allocation4 [shape = 'u8[24576]{0}', space=vmem, size = 0x6000, scoped, tag = 'input window, operand 1, single buffered']
    #allocation5 [shape = 's32[1]{0}', space=sflag, size = 0x4, scoped, tag = 'scoped memory for tpu_custom_call.1']
    #allocation6 [shape = 'u8[131072]{0}', space=vmem, size = 0x20000, scoped, tag = 'input window, operand 3, single buffered']
    #allocation7 [shape = 'u8[131072]{0}', space=vmem, size = 0x20000, scoped, tag = 'input window, operand 5, single buffered']
    #allocation8 [shape = 's32[1]{0}', space=sflag, size = 0x4, scoped, tag = 'scoped memory for tpu_custom_call.1']
    %16 = vsyncpa [#allocation3], 0
    %17 = vsyncpa [#allocation5], 0
    %18 = vsyncpa [#allocation8], 0
    // Predicated region
    $region2: #{tpu_custom_call.1} parent=1 // pred_check
      _
    $region3: #{tpu_custom_call.1} parent=1 // pred_check_branch
      %20 = sbr.rel (0) target = $region5
    $region4: #{tpu_custom_call.1} parent=1 // pred_region
      %s22 = ssub.s32 64, 64
      %23 = vsyncadd [#allocation3], %s22
      %s25 = sshll.u32 [#allocation2], 4
      %s26 = int_to_ptr.vmem [resolvable:$true] %s25
      %28 = dma.hbm_to_vmem [thread:$0]  %s0, 64, %s26, [#allocation3]
    $region5: #{tpu_custom_call.1} parent=1 // pred_fallthru
      _
    // Predicated region
    $region6: #{tpu_custom_call.1} parent=1 // pred_check
      _
    $region7: #{tpu_custom_call.1} parent=1 // pred_check_branch
      %30 = sbr.rel (0) target = $region9
    $region8: #{tpu_custom_call.1} parent=1 // pred_region
      %s32 = ssub.s32 768, 768
      %33 = vsyncadd [#allocation5], %s32
      %s34 = sshll.u32 [#allocation4], 4
      %s35 = int_to_ptr.vmem [resolvable:$true] %s34
      %40 = dma.hbm_to_vmem [thread:$0]  %s1, 768, %s35, [#allocation5], 256, 256, 16
    $region9: #{tpu_custom_call.1} parent=1 // pred_fallthru
      _
    // Predicated region
    $region10: #{tpu_custom_call.1} parent=1 // pred_check
      _
    $region11: #{tpu_custom_call.1} parent=1 // pred_check_branch
      %42 = sbr.rel (0) target = $region13
    $region12: #{tpu_custom_call.1} parent=1 // pred_region
      _
    $region13: #{tpu_custom_call.1} parent=1 // pred_fallthru
      _
    // Predicated region
    $region14: #{tpu_custom_call.1} parent=1 // pred_check
      _
    $region15: #{tpu_custom_call.1} parent=1 // pred_check_branch
      %44 = sbr.rel (0) target = $region17
    $region16: #{tpu_custom_call.1} parent=1 // pred_region
      %s46 = ssub.s32 4096, 4096
      %47 = vsyncadd [#allocation5], %s46
      %s48 = sshll.u32 [#allocation6], 4
      %s49 = int_to_ptr.vmem [resolvable:$true] %s48
      %54 = dma.hbm_to_vmem [thread:$0]  %s3, 4096, %s49, [#allocation5], 128, 128, 8
    $region17: #{tpu_custom_call.1} parent=1 // pred_fallthru
      _
    // Predicated region
    $region18: #{tpu_custom_call.1} parent=1 // pred_check
      _
    $region19: #{tpu_custom_call.1} parent=1 // pred_check_branch
      %56 = sbr.rel (0) target = $region21
    $region20: #{tpu_custom_call.1} parent=1 // pred_region
      _
    $region21: #{tpu_custom_call.1} parent=1 // pred_fallthru
      _
    // Predicated region
    $region22: #{tpu_custom_call.1} parent=1 // pred_check
      _
    $region23: #{tpu_custom_call.1} parent=1 // pred_check_branch
      %58 = sbr.rel (0) target = $region25
    $region24: #{tpu_custom_call.1} parent=1 // pred_region
      %s60 = ssub.s32 4096, 4096
      %61 = vsyncadd [#allocation8], %s60
      %s62 = sshll.u32 [#allocation7], 4
      %s63 = int_to_ptr.vmem [resolvable:$true] %s62
      %68 = dma.hbm_to_vmem [thread:$0]  %s5, 4096, %s63, [#allocation8], 128, 128, 8
    $region25: #{tpu_custom_call.1} parent=1 // pred_fallthru
      _
    // Predicated region
    $region26: #{tpu_custom_call.1} parent=1 // pred_check
      _
    $region27: #{tpu_custom_call.1} parent=1 // pred_check_branch
      %70 = sbr.rel (0) target = $region29
    $region28: #{tpu_custom_call.1} parent=1 // pred_region
      _
    $region29: #{tpu_custom_call.1} parent=1 // pred_fallthru
      _
    // Predicated region
    $region30: #{tpu_custom_call.1} parent=1 // pred_check
      _
    $region31: #{tpu_custom_call.1} parent=1 // pred_check_branch
      %72 = sbr.rel (0) target = $region33
    $region32: #{tpu_custom_call.1} parent=1 // pred_region
      _
    $region33: #{tpu_custom_call.1} parent=1 // pred_fallthru
      _
    // Predicated region
    $region34: #{tpu_custom_call.1} parent=1 // pred_check
      _
    $region35: #{tpu_custom_call.1} parent=1 // pred_check_branch
      %74 = sbr.rel (0) target = $region37
    $region36: #{tpu_custom_call.1} parent=1 // pred_region
      _
    $region37: #{tpu_custom_call.1} parent=1 // pred_fallthru
      _
    // Predicated region
    $region38: #{tpu_custom_call.1} parent=1 // pred_check
      _
    $region39: #{tpu_custom_call.1} parent=1 // pred_check_branch
      %76 = sbr.rel (0) target = $region41
    $region40: #{tpu_custom_call.1} parent=1 // pred_region
      %77 = dma.done [#allocation3], 64
    $region41: #{tpu_custom_call.1} parent=1 // pred_fallthru
      _
    // Predicated region
    $region42: #{tpu_custom_call.1} parent=1 // pred_check
      _
    $region43: #{tpu_custom_call.1} parent=1 // pred_check_branch
      %79 = sbr.rel (0) target = $region45
    $region44: #{tpu_custom_call.1} parent=1 // pred_region
      %80 = dma.done [#allocation5], 768
    $region45: #{tpu_custom_call.1} parent=1 // pred_fallthru
      _
    // Predicated region
    $region46: #{tpu_custom_call.1} parent=1 // pred_check
      _
    $region47: #{tpu_custom_call.1} parent=1 // pred_check_branch
      %82 = sbr.rel (0) target = $region49
    $region48: #{tpu_custom_call.1} parent=1 // pred_region
      %83 = dma.done [#allocation5], 4096
    $region49: #{tpu_custom_call.1} parent=1 // pred_fallthru
      _
    // Predicated region
    $region50: #{tpu_custom_call.1} parent=1 // pred_check
      _
    $region51: #{tpu_custom_call.1} parent=1 // pred_check_branch
      %85 = sbr.rel (0) target = $region53
    $region52: #{tpu_custom_call.1} parent=1 // pred_region
      %86 = dma.done [#allocation8], 4096
    $region53: #{tpu_custom_call.1} parent=1 // pred_fallthru
      _
    %v88 = vld [vmem:[#allocation2] sm:$0xf]
    %v89 = vld [vmem:[#allocation4] sm:$0xff]
    %v90 = vld [vmem:[#allocation4 + $0x8] sm:$0xff]
    %v91 = vld [vmem:[#allocation4 + $0x10] sm:$0xff]
    %v92 = vld [vmem:[#allocation4 + $0x18] sm:$0xff]
    %v93 = vld [vmem:[#allocation4 + $0x20] sm:$0xff]
    %v94 = vld [vmem:[#allocation4 + $0x28] sm:$0xff]
    %v95 = vld [vmem:[%s2] sm:$0xf]
    %v97 = vlaneseq
    %v98 = vshrl.u32 %v97, 7
    %v99 = vsub.s32 0, %v98
    %v100 = vrot.slane %v95, %v99
    %v101 = vlaneseq
    %v102 = vshrl.u32 %v101, 7
    %v103 = vsub.s32 1, %v102
    %v104 = vrot.slane %v95, %v103
    %v105 = vlaneseq
    %v106 = vshrl.u32 %v105, 7
    %v107 = vsub.s32 2, %v106
    %v108 = vrot.slane %v95, %v107
    %v109 = vlaneseq
    %v110 = vshrl.u32 %v109, 7
    %v111 = vsub.s32 3, %v110
    %v112 = vrot.slane %v95, %v111
    %v123 = vunpack.c.l.b16 %v89
    %v124 = vunpack.c.h.b16 %v89
    %v125 = vunpack.c.l.b16 %v90
    %v126 = vunpack.c.h.b16 %v90
    %v127 = vunpack.c.l.b16 %v91
    %v128 = vunpack.c.h.b16 %v91
    %v129 = vunpack.c.l.b16 %v92
    %v130 = vunpack.c.h.b16 %v92
    %v131 = vunpack.c.l.b16 %v93
    %v132 = vunpack.c.h.b16 %v93
    %v133 = vunpack.c.l.b16 %v94
    %v134 = vunpack.c.h.b16 %v94
    %v135 = vpack.c.b16 %v127, %v123
    %v136 = vpack.c.b16 %v128, %v124
    %v137 = vpack.c.b16 %v129, %v125
    %v138 = vpack.c.b16 %v130, %v126
    %v139 = vpack.c.b16 %v131, %v131
    %v140 = vpack.c.b16 %v132, %v132
    %v141 = vpack.c.b16 %v133, %v133
    %v142 = vpack.c.b16 %v134, %v134
    %vm147 = vcmask 187392
    %v149 = vsel %vm147, %v88, 0
    %vm151 = vcmask 1042432
    %vm152 = vcmask 1043456
    %v153 = vsel %vm151, 4294967295, 65535
    %v154 = vsel %vm152, %v153, 0
    %v156 = vand.u32 %v139, %v154
    %v159 = vand.u32 %v140, %v154
    %v162 = vand.u32 %v141, %v154
    %v165 = vand.u32 %v142, %v154
    %167 = vmatprep.subr.bf16.mxu0 %v136
    %168 = vmatpush1.bf16.msra.mxu0 %v135
    %169 = vmatprep.subr.bf16.mxu0 %v159
    %170 = vmatpush1.bf16.msra.mxu0 %v156
    %171 = vmatprep.subr.bf16.mxu0 0
    %172 = vmatpush1.bf16.msra.mxu0 0
    %173 = vmatprep.subr.bf16.mxu0 0
    %174 = vmatpush1.bf16.msra.mxu0 0
    %175 = vmatprep.subr.bf16.mxu0 0
    %176 = vmatpush1.bf16.msra.mxu0 0
    %177 = vmatprep.subr.bf16.mxu0 0
    %178 = vmatpush1.bf16.msra.mxu0 0
    %179 = vmatprep.subr.bf16.mxu0 0
    %180 = vmatpush1.bf16.msra.mxu0 0
    %181 = vmatprep.subr.bf16.mxu0 0
    %182 = vmatpush1.bf16.msra.mxu0 0
    %183 = vmatprep.subr.bf16.mxu0 0
    %184 = vmatpush1.bf16.msra.mxu0 0
    %185 = vmatprep.subr.bf16.mxu0 0
    %186 = vmatpush1.bf16.msra.mxu0 0
    %187 = vmatprep.subr.bf16.mxu0 0
    %188 = vmatpush1.bf16.msra.mxu0 0
    %189 = vmatprep.subr.bf16.mxu0 0
    %190 = vmatpush1.bf16.msra.mxu0 0
    %191 = vmatprep.subr.bf16.mxu0 0
    %192 = vmatpush1.bf16.msra.mxu0 0
    %193 = vmatprep.subr.bf16.mxu0 0
    %194 = vmatpush1.bf16.msra.mxu0 0
    %195 = vmatprep.subr.bf16.mxu0 0
    %196 = vmatpush1.bf16.msra.mxu0 0
    %197 = vmatprep.subr.bf16.mxu0 0
    %198 = vmatpush1.bf16.msra.mxu0 0
    %199 = vmatprep.mubr.bf16.mxu0 0
    %200 = vmatmul.mubr.bf16.gmra.mrb[0].mxu0 %v149
    %v201 = vpop.f32.mrb[0].mxu0
    %v202 = vadd.f32 %v100, %v201
    %v203 = vpop.f32.mrb[0].mxu0
    %v204 = vadd.f32 %v104, %v203
    %v205 = vpop.f32.mrb[0].mxu0
    %v206 = vpop.f32.mrb[0].mxu0
    %207 = vdwg.mxu0
    %208 = vmatprep.subr.bf16.mxu0 %v138
    %209 = vmatpush1.bf16.msra.mxu0 %v137
    %210 = vmatprep.subr.bf16.mxu0 %v165
    %211 = vmatpush1.bf16.msra.mxu0 %v162
    %212 = vmatprep.subr.bf16.mxu0 0
    %213 = vmatpush1.bf16.msra.mxu0 0
    %214 = vmatprep.subr.bf16.mxu0 0
    %215 = vmatpush1.bf16.msra.mxu0 0
    %216 = vmatprep.subr.bf16.mxu0 0
    %217 = vmatpush1.bf16.msra.mxu0 0
    %218 = vmatprep.subr.bf16.mxu0 0
    %219 = vmatpush1.bf16.msra.mxu0 0
    %220 = vmatprep.subr.bf16.mxu0 0
    %221 = vmatpush1.bf16.msra.mxu0 0
    %222 = vmatprep.subr.bf16.mxu0 0
    %223 = vmatpush1.bf16.msra.mxu0 0
    %224 = vmatprep.subr.bf16.mxu0 0
    %225 = vmatpush1.bf16.msra.mxu0 0
    %226 = vmatprep.subr.bf16.mxu0 0
    %227 = vmatpush1.bf16.msra.mxu0 0
    %228 = vmatprep.subr.bf16.mxu0 0
    %229 = vmatpush1.bf16.msra.mxu0 0
    %230 = vmatprep.subr.bf16.mxu0 0
    %231 = vmatpush1.bf16.msra.mxu0 0
    %232 = vmatprep.subr.bf16.mxu0 0
    %233 = vmatpush1.bf16.msra.mxu0 0
    %234 = vmatprep.subr.bf16.mxu0 0
    %235 = vmatpush1.bf16.msra.mxu0 0
    %236 = vmatprep.subr.bf16.mxu0 0
    %237 = vmatpush1.bf16.msra.mxu0 0
    %238 = vmatprep.subr.bf16.mxu0 0
    %239 = vmatpush1.bf16.msra.mxu0 0
    %240 = vmatprep.mubr.bf16.mxu0 0
    %241 = vmatmul.mubr.bf16.gmra.mrb[0].mxu0 %v149
    %v242 = vpop.f32.mrb[0].mxu0
    %v243 = vadd.f32 %v108, %v242
    %v244 = vpop.f32.mrb[0].mxu0
    %v245 = vadd.f32 %v112, %v244
    %v246 = vpop.f32.mrb[0].mxu0
    %v247 = vpop.f32.mrb[0].mxu0
    %248 = vdwg.mxu0
    %v249 = vmax.f32 %v202, 0.0
    %v250 = vmax.f32 %v204, 0.0
    %v251 = vmax.f32 %v243, 0.0
    %v252 = vmax.f32 %v245, 0.0
    %v253 = vpack.c.bf16 %v249, %v249
    %v254 = vpack.c.bf16 %v250, %v250
    %v255 = vpack.c.bf16 %v251, %v251
    %v256 = vpack.c.bf16 %v252, %v252
    %v257 = vld [vmem:[#allocation6] sm:$0xff]
    %v258 = vld [vmem:[#allocation6 + $0x8] sm:$0xff]
    %v259 = vld [vmem:[#allocation6 + $0x10] sm:$0xff]
    %v260 = vld [vmem:[#allocation6 + $0x18] sm:$0xff]
    %v261 = vld [vmem:[#allocation6 + $0x20] sm:$0xff]
    %v262 = vld [vmem:[#allocation6 + $0x28] sm:$0xff]
    %v263 = vld [vmem:[#allocation6 + $0x30] sm:$0xff]
    %v264 = vld [vmem:[#allocation6 + $0x38] sm:$0xff]
    %v265 = vld [vmem:[#allocation6 + $0x40] sm:$0xff]
    %v266 = vld [vmem:[#allocation6 + $0x48] sm:$0xff]
    %v267 = vld [vmem:[#allocation6 + $0x50] sm:$0xff]
    %v268 = vld [vmem:[#allocation6 + $0x58] sm:$0xff]
    %v269 = vld [vmem:[#allocation6 + $0x60] sm:$0xff]
    %v270 = vld [vmem:[#allocation6 + $0x68] sm:$0xff]
    %v271 = vld [vmem:[#allocation6 + $0x70] sm:$0xff]
    %v272 = vld [vmem:[#allocation6 + $0x78] sm:$0xff]
    %v273 = vld [vmem:[#allocation6 + $0x80] sm:$0xff]
    %v274 = vld [vmem:[#allocation6 + $0x88] sm:$0xff]
    %v275 = vld [vmem:[#allocation6 + $0x90] sm:$0xff]
    %v276 = vld [vmem:[#allocation6 + $0x98] sm:$0xff]
    %v277 = vld [vmem:[#allocation6 + $0xa0] sm:$0xff]
    %v278 = vld [vmem:[#allocation6 + $0xa8] sm:$0xff]
    %v279 = vld [vmem:[#allocation6 + $0xb0] sm:$0xff]
    %v280 = vld [vmem:[#allocation6 + $0xb8] sm:$0xff]
    %v281 = vld [vmem:[#allocation6 + $0xc0] sm:$0xff]
    %v282 = vld [vmem:[#allocation6 + $0xc8] sm:$0xff]
    %v283 = vld [vmem:[#allocation6 + $0xd0] sm:$0xff]
    %v284 = vld [vmem:[#allocation6 + $0xd8] sm:$0xff]
    %v285 = vld [vmem:[#allocation6 + $0xe0] sm:$0xff]
    %v286 = vld [vmem:[#allocation6 + $0xe8] sm:$0xff]
    %v287 = vld [vmem:[#allocation6 + $0xf0] sm:$0xff]
    %v288 = vld [vmem:[#allocation6 + $0xf8] sm:$0xff]
    %v289 = vld [vmem:[%s4] sm:$0x3]
    %v291 = vlaneseq
    %v292 = vshrl.u32 %v291, 7
    %v293 = vsub.s32 0, %v292
    %v294 = vrot.slane %v289, %v293
    %v295 = vlaneseq
    %v296 = vshrl.u32 %v295, 7
    %v297 = vsub.s32 1, %v296
    %v298 = vrot.slane %v289, %v297
    %v333 = vunpack.c.l.b16 %v257
    %v334 = vunpack.c.h.b16 %v257
    %v335 = vunpack.c.l.b16 %v258
    %v336 = vunpack.c.h.b16 %v258
    %v337 = vunpack.c.l.b16 %v259
    %v338 = vunpack.c.h.b16 %v259
    %v339 = vunpack.c.l.b16 %v260
    %v340 = vunpack.c.h.b16 %v260
    %v341 = vunpack.c.l.b16 %v261
    %v342 = vunpack.c.h.b16 %v261
    %v343 = vunpack.c.l.b16 %v262
    %v344 = vunpack.c.h.b16 %v262
    %v345 = vunpack.c.l.b16 %v263
    %v346 = vunpack.c.h.b16 %v263
    %v347 = vunpack.c.l.b16 %v264
    %v348 = vunpack.c.h.b16 %v264
    %v349 = vunpack.c.l.b16 %v265
    %v350 = vunpack.c.h.b16 %v265
    %v351 = vunpack.c.l.b16 %v266
    %v352 = vunpack.c.h.b16 %v266
    %v353 = vunpack.c.l.b16 %v267
    %v354 = vunpack.c.h.b16 %v267
    %v355 = vunpack.c.l.b16 %v268
    %v356 = vunpack.c.h.b16 %v268
    %v357 = vunpack.c.l.b16 %v269
    %v358 = vunpack.c.h.b16 %v269
    %v359 = vunpack.c.l.b16 %v270
    %v360 = vunpack.c.h.b16 %v270
    %v361 = vunpack.c.l.b16 %v271
    %v362 = vunpack.c.h.b16 %v271
    %v363 = vunpack.c.l.b16 %v272
    %v364 = vunpack.c.h.b16 %v272
    %v365 = vunpack.c.l.b16 %v273
    %v366 = vunpack.c.h.b16 %v273
    %v367 = vunpack.c.l.b16 %v274
    %v368 = vunpack.c.h.b16 %v274
    %v369 = vunpack.c.l.b16 %v275
    %v370 = vunpack.c.h.b16 %v275
    %v371 = vunpack.c.l.b16 %v276
    %v372 = vunpack.c.h.b16 %v276
    %v373 = vunpack.c.l.b16 %v277
    %v374 = vunpack.c.h.b16 %v277
    %v375 = vunpack.c.l.b16 %v278
    %v376 = vunpack.c.h.b16 %v278
    %v377 = vunpack.c.l.b16 %v279
    %v378 = vunpack.c.h.b16 %v279
    %v379 = vunpack.c.l.b16 %v280
    %v380 = vunpack.c.h.b16 %v280
    %v381 = vunpack.c.l.b16 %v281
    %v382 = vunpack.c.h.b16 %v281
    %v383 = vunpack.c.l.b16 %v282
    %v384 = vunpack.c.h.b16 %v282
    %v385 = vunpack.c.l.b16 %v283
    %v386 = vunpack.c.h.b16 %v283
    %v387 = vunpack.c.l.b16 %v284
    %v388 = vunpack.c.h.b16 %v284
    %v389 = vunpack.c.l.b16 %v285
    %v390 = vunpack.c.h.b16 %v285
    %v391 = vunpack.c.l.b16 %v286
    %v392 = vunpack.c.h.b16 %v286
    %v393 = vunpack.c.l.b16 %v287
    %v394 = vunpack.c.h.b16 %v287
    %v395 = vunpack.c.l.b16 %v288
    %v396 = vunpack.c.h.b16 %v288
    %v397 = vpack.c.b16 %v335, %v333
    %v398 = vpack.c.b16 %v336, %v334
    %v399 = vpack.c.b16 %v339, %v337
    %v400 = vpack.c.b16 %v340, %v338
    %v401 = vpack.c.b16 %v343, %v341
    %v402 = vpack.c.b16 %v344, %v342
    %v403 = vpack.c.b16 %v347, %v345
    %v404 = vpack.c.b16 %v348, %v346
    %v405 = vpack.c.b16 %v351, %v349
    %v406 = vpack.c.b16 %v352, %v350
    %v407 = vpack.c.b16 %v355, %v353
    %v408 = vpack.c.b16 %v356, %v354
    %v409 = vpack.c.b16 %v359, %v357
    %v410 = vpack.c.b16 %v360, %v358
    %v411 = vpack.c.b16 %v363, %v361
    %v412 = vpack.c.b16 %v364, %v362
    %v413 = vpack.c.b16 %v367, %v365
    %v414 = vpack.c.b16 %v368, %v366
    %v415 = vpack.c.b16 %v371, %v369
    %v416 = vpack.c.b16 %v372, %v370
    %v417 = vpack.c.b16 %v375, %v373
    %v418 = vpack.c.b16 %v376, %v374
    %v419 = vpack.c.b16 %v379, %v377
    %v420 = vpack.c.b16 %v380, %v378
    %v421 = vpack.c.b16 %v383, %v381
    %v422 = vpack.c.b16 %v384, %v382
    %v423 = vpack.c.b16 %v387, %v385
    %v424 = vpack.c.b16 %v388, %v386
    %v425 = vpack.c.b16 %v391, %v389
    %v426 = vpack.c.b16 %v392, %v390
    %v427 = vpack.c.b16 %v395, %v393
    %v428 = vpack.c.b16 %v396, %v394
    %461 = vmatprep.subr.bf16.mxu0 %v398
    %462 = vmatpush1.bf16.msra.mxu0 %v397
    %463 = vmatprep.subr.bf16.mxu0 %v400
    %464 = vmatpush1.bf16.msra.mxu0 %v399
    %465 = vmatprep.subr.bf16.mxu0 %v402
    %466 = vmatpush1.bf16.msra.mxu0 %v401
    %467 = vmatprep.subr.bf16.mxu0 %v404
    %468 = vmatpush1.bf16.msra.mxu0 %v403
    %469 = vmatprep.subr.bf16.mxu0 %v406
    %470 = vmatpush1.bf16.msra.mxu0 %v405
    %471 = vmatprep.subr.bf16.mxu0 %v408
    %472 = vmatpush1.bf16.msra.mxu0 %v407
    %473 = vmatprep.subr.bf16.mxu0 %v410
    %474 = vmatpush1.bf16.msra.mxu0 %v409
    %475 = vmatprep.subr.bf16.mxu0 %v412
    %476 = vmatpush1.bf16.msra.mxu0 %v411
    %477 = vmatprep.subr.bf16.mxu0 %v414
    %478 = vmatpush1.bf16.msra.mxu0 %v413
    %479 = vmatprep.subr.bf16.mxu0 %v416
    %480 = vmatpush1.bf16.msra.mxu0 %v415
    %481 = vmatprep.subr.bf16.mxu0 %v418
    %482 = vmatpush1.bf16.msra.mxu0 %v417
    %483 = vmatprep.subr.bf16.mxu0 %v420
    %484 = vmatpush1.bf16.msra.mxu0 %v419
    %485 = vmatprep.subr.bf16.mxu0 %v422
    %486 = vmatpush1.bf16.msra.mxu0 %v421
    %487 = vmatprep.subr.bf16.mxu0 %v424
    %488 = vmatpush1.bf16.msra.mxu0 %v423
    %489 = vmatprep.subr.bf16.mxu0 %v426
    %490 = vmatpush1.bf16.msra.mxu0 %v425
    %491 = vmatprep.subr.bf16.mxu0 %v428
    %492 = vmatpush1.bf16.msra.mxu0 %v427
    %493 = vmatprep.mubr.bf16.mxu0 %v254
    %494 = vmatmul.mubr.bf16.gmra.mrb[0].mxu0 %v253
    %v495 = vpop.f32.mrb[0].mxu0
    %v496 = vadd.f32 %v294, %v495
    %v497 = vpop.f32.mrb[0].mxu0
    %v498 = vadd.f32 %v298, %v497
    %v499 = vpop.f32.mrb[0].mxu0
    %v500 = vpop.f32.mrb[0].mxu0
    %501 = vdwg.mxu0
    %v502 = vmax.f32 %v496, 0.0
    %v503 = vmax.f32 %v498, 0.0
    %v504 = vld [vmem:[#allocation7] sm:$0xff]
    %v505 = vld [vmem:[#allocation7 + $0x8] sm:$0xff]
    %v506 = vld [vmem:[#allocation7 + $0x10] sm:$0xff]
    %v507 = vld [vmem:[#allocation7 + $0x18] sm:$0xff]
    %v508 = vld [vmem:[#allocation7 + $0x20] sm:$0xff]
    %v509 = vld [vmem:[#allocation7 + $0x28] sm:$0xff]
    %v510 = vld [vmem:[#allocation7 + $0x30] sm:$0xff]
    %v511 = vld [vmem:[#allocation7 + $0x38] sm:$0xff]
    %v512 = vld [vmem:[#allocation7 + $0x40] sm:$0xff]
    %v513 = vld [vmem:[#allocation7 + $0x48] sm:$0xff]
    %v514 = vld [vmem:[#allocation7 + $0x50] sm:$0xff]
    %v515 = vld [vmem:[#allocation7 + $0x58] sm:$0xff]
    %v516 = vld [vmem:[#allocation7 + $0x60] sm:$0xff]
    %v517 = vld [vmem:[#allocation7 + $0x68] sm:$0xff]
    %v518 = vld [vmem:[#allocation7 + $0x70] sm:$0xff]
    %v519 = vld [vmem:[#allocation7 + $0x78] sm:$0xff]
    %v520 = vld [vmem:[#allocation7 + $0x80] sm:$0xff]
    %v521 = vld [vmem:[#allocation7 + $0x88] sm:$0xff]
    %v522 = vld [vmem:[#allocation7 + $0x90] sm:$0xff]
    %v523 = vld [vmem:[#allocation7 + $0x98] sm:$0xff]
    %v524 = vld [vmem:[#allocation7 + $0xa0] sm:$0xff]
    %v525 = vld [vmem:[#allocation7 + $0xa8] sm:$0xff]
    %v526 = vld [vmem:[#allocation7 + $0xb0] sm:$0xff]
    %v527 = vld [vmem:[#allocation7 + $0xb8] sm:$0xff]
    %v528 = vld [vmem:[#allocation7 + $0xc0] sm:$0xff]
    %v529 = vld [vmem:[#allocation7 + $0xc8] sm:$0xff]
    %v530 = vld [vmem:[#allocation7 + $0xd0] sm:$0xff]
    %v531 = vld [vmem:[#allocation7 + $0xd8] sm:$0xff]
    %v532 = vld [vmem:[#allocation7 + $0xe0] sm:$0xff]
    %v533 = vld [vmem:[#allocation7 + $0xe8] sm:$0xff]
    %v534 = vld [vmem:[#allocation7 + $0xf0] sm:$0xff]
    %v535 = vld [vmem:[#allocation7 + $0xf8] sm:$0xff]
    %v536 = vld [vmem:[%s6] sm:$0x3]
    %v538 = vlaneseq
    %v539 = vshrl.u32 %v538, 7
    %v540 = vsub.s32 0, %v539
    %v541 = vrot.slane %v536, %v540
    %v542 = vlaneseq
    %v543 = vshrl.u32 %v542, 7
    %v544 = vsub.s32 1, %v543
    %v545 = vrot.slane %v536, %v544
    %v580 = vunpack.c.l.b16 %v504
    %v581 = vunpack.c.h.b16 %v504
    %v582 = vunpack.c.l.b16 %v505
    %v583 = vunpack.c.h.b16 %v505
    %v584 = vunpack.c.l.b16 %v506
    %v585 = vunpack.c.h.b16 %v506
    %v586 = vunpack.c.l.b16 %v507
    %v587 = vunpack.c.h.b16 %v507
    %v588 = vunpack.c.l.b16 %v508
    %v589 = vunpack.c.h.b16 %v508
    %v590 = vunpack.c.l.b16 %v509
    %v591 = vunpack.c.h.b16 %v509
    %v592 = vunpack.c.l.b16 %v510
    %v593 = vunpack.c.h.b16 %v510
    %v594 = vunpack.c.l.b16 %v511
    %v595 = vunpack.c.h.b16 %v511
    %v596 = vunpack.c.l.b16 %v512
    %v597 = vunpack.c.h.b16 %v512
    %v598 = vunpack.c.l.b16 %v513
    %v599 = vunpack.c.h.b16 %v513
    %v600 = vunpack.c.l.b16 %v514
    %v601 = vunpack.c.h.b16 %v514
    %v602 = vunpack.c.l.b16 %v515
    %v603 = vunpack.c.h.b16 %v515
    %v604 = vunpack.c.l.b16 %v516
    %v605 = vunpack.c.h.b16 %v516
    %v606 = vunpack.c.l.b16 %v517
    %v607 = vunpack.c.h.b16 %v517
    %v608 = vunpack.c.l.b16 %v518
    %v609 = vunpack.c.h.b16 %v518
    %v610 = vunpack.c.l.b16 %v519
    %v611 = vunpack.c.h.b16 %v519
    %v612 = vunpack.c.l.b16 %v520
    %v613 = vunpack.c.h.b16 %v520
    %v614 = vunpack.c.l.b16 %v521
    %v615 = vunpack.c.h.b16 %v521
    %v616 = vunpack.c.l.b16 %v522
    %v617 = vunpack.c.h.b16 %v522
    %v618 = vunpack.c.l.b16 %v523
    %v619 = vunpack.c.h.b16 %v523
    %v620 = vunpack.c.l.b16 %v524
    %v621 = vunpack.c.h.b16 %v524
    %v622 = vunpack.c.l.b16 %v525
    %v623 = vunpack.c.h.b16 %v525
    %v624 = vunpack.c.l.b16 %v526
    %v625 = vunpack.c.h.b16 %v526
    %v626 = vunpack.c.l.b16 %v527
    %v627 = vunpack.c.h.b16 %v527
    %v628 = vunpack.c.l.b16 %v528
    %v629 = vunpack.c.h.b16 %v528
    %v630 = vunpack.c.l.b16 %v529
    %v631 = vunpack.c.h.b16 %v529
    %v632 = vunpack.c.l.b16 %v530
    %v633 = vunpack.c.h.b16 %v530
    %v634 = vunpack.c.l.b16 %v531
    %v635 = vunpack.c.h.b16 %v531
    %v636 = vunpack.c.l.b16 %v532
    %v637 = vunpack.c.h.b16 %v532
    %v638 = vunpack.c.l.b16 %v533
    %v639 = vunpack.c.h.b16 %v533
    %v640 = vunpack.c.l.b16 %v534
    %v641 = vunpack.c.h.b16 %v534
    %v642 = vunpack.c.l.b16 %v535
    %v643 = vunpack.c.h.b16 %v535
    %v644 = vpack.c.b16 %v582, %v580
    %v645 = vpack.c.b16 %v583, %v581
    %v646 = vpack.c.b16 %v586, %v584
    %v647 = vpack.c.b16 %v587, %v585
    %v648 = vpack.c.b16 %v590, %v588
    %v649 = vpack.c.b16 %v591, %v589
    %v650 = vpack.c.b16 %v594, %v592
    %v651 = vpack.c.b16 %v595, %v593
    %v652 = vpack.c.b16 %v598, %v596
    %v653 = vpack.c.b16 %v599, %v597
    %v654 = vpack.c.b16 %v602, %v600
    %v655 = vpack.c.b16 %v603, %v601
    %v656 = vpack.c.b16 %v606, %v604
    %v657 = vpack.c.b16 %v607, %v605
    %v658 = vpack.c.b16 %v610, %v608
    %v659 = vpack.c.b16 %v611, %v609
    %v660 = vpack.c.b16 %v614, %v612
    %v661 = vpack.c.b16 %v615, %v613
    %v662 = vpack.c.b16 %v618, %v616
    %v663 = vpack.c.b16 %v619, %v617
    %v664 = vpack.c.b16 %v622, %v620
    %v665 = vpack.c.b16 %v623, %v621
    %v666 = vpack.c.b16 %v626, %v624
    %v667 = vpack.c.b16 %v627, %v625
    %v668 = vpack.c.b16 %v630, %v628
    %v669 = vpack.c.b16 %v631, %v629
    %v670 = vpack.c.b16 %v634, %v632
    %v671 = vpack.c.b16 %v635, %v633
    %v672 = vpack.c.b16 %v638, %v636
    %v673 = vpack.c.b16 %v639, %v637
    %v674 = vpack.c.b16 %v642, %v640
    %v675 = vpack.c.b16 %v643, %v641
    %708 = vmatprep.subr.bf16.mxu0 %v645
    %709 = vmatpush1.bf16.msra.mxu0 %v644
    %710 = vmatprep.subr.bf16.mxu0 %v647
    %711 = vmatpush1.bf16.msra.mxu0 %v646
    %712 = vmatprep.subr.bf16.mxu0 %v649
    %713 = vmatpush1.bf16.msra.mxu0 %v648
    %714 = vmatprep.subr.bf16.mxu0 %v651
    %715 = vmatpush1.bf16.msra.mxu0 %v650
    %716 = vmatprep.subr.bf16.mxu0 %v653
    %717 = vmatpush1.bf16.msra.mxu0 %v652
    %718 = vmatprep.subr.bf16.mxu0 %v655
    %719 = vmatpush1.bf16.msra.mxu0 %v654
    %720 = vmatprep.subr.bf16.mxu0 %v657
    %721 = vmatpush1.bf16.msra.mxu0 %v656
    %722 = vmatprep.subr.bf16.mxu0 %v659
    %723 = vmatpush1.bf16.msra.mxu0 %v658
    %724 = vmatprep.subr.bf16.mxu0 %v661
    %725 = vmatpush1.bf16.msra.mxu0 %v660
    %726 = vmatprep.subr.bf16.mxu0 %v663
    %727 = vmatpush1.bf16.msra.mxu0 %v662
    %728 = vmatprep.subr.bf16.mxu0 %v665
    %729 = vmatpush1.bf16.msra.mxu0 %v664
    %730 = vmatprep.subr.bf16.mxu0 %v667
    %731 = vmatpush1.bf16.msra.mxu0 %v666
    %732 = vmatprep.subr.bf16.mxu0 %v669
    %733 = vmatpush1.bf16.msra.mxu0 %v668
    %734 = vmatprep.subr.bf16.mxu0 %v671
    %735 = vmatpush1.bf16.msra.mxu0 %v670
    %736 = vmatprep.subr.bf16.mxu0 %v673
    %737 = vmatpush1.bf16.msra.mxu0 %v672
    %738 = vmatprep.subr.bf16.mxu0 %v675
    %739 = vmatpush1.bf16.msra.mxu0 %v674
    %740 = vmatprep.mubr.bf16.mxu0 %v256
    %741 = vmatmul.mubr.bf16.gmra.mrb[0].mxu0 %v255
    %v742 = vpop.f32.mrb[0].mxu0
    %v743 = vadd.f32 %v541, %v742
    %v744 = vpop.f32.mrb[0].mxu0
    %v745 = vadd.f32 %v545, %v744
    %v746 = vpop.f32.mrb[0].mxu0
    %v747 = vpop.f32.mrb[0].mxu0
    %748 = vdwg.mxu0
    %v749 = vmax.f32 %v743, 0.0
    %v750 = vmax.f32 %v745, 0.0
    %v751 = vld [vmem:[%s7] sm:$0xf]
    %v753 = vlaneseq
    %v754 = vshrl.u32 %v753, 7
    %v755 = vsub.s32 0, %v754
    %v756 = vrot.slane %v751, %v755
    %v757 = vlaneseq
    %v758 = vshrl.u32 %v757, 7
    %v759 = vsub.s32 2, %v758
    %v760 = vrot.slane %v751, %v759
    %v763 = vlaneseq
    %v764 = vshrl.u32 %v763, 7
    %v765 = vsub.s32 0, %v764
    %v766 = vrot.slane %v756, %v765
    %v767 = vlaneseq
    %v768 = vshrl.u32 %v767, 7
    %v769 = vsub.s32 0, %v768
    %v770 = vrot.slane %v760, %v769
    %v771 = vmul.f32 %v502, %v766
    %v772 = vmul.f32 %v503, %v770
    %v773 = vadd.f32 %v771, %v772
    %774 = vadd.xlane.f32.xlu0 %v773
    %v775 = vpop.xlane.xlu0 %774
    %v776 = vld [vmem:[%s8] sm:$0x1]
    %v778 = vlaneseq
    %v779 = vshrl.u32 %v778, 7
    %v780 = vsub.s32 0, %v779
    %v781 = vrot.slane %v776, %v780
    %v783 = vadd.f32 %v775, %v781
    %v784 = vlaneseq
    %v785 = vshrl.u32 %v784, 7
    %v786 = vsub.s32 1, %v785
    %v787 = vrot.slane %v751, %v786
    %v788 = vlaneseq
    %v789 = vshrl.u32 %v788, 7
    %v790 = vsub.s32 3, %v789
    %v791 = vrot.slane %v751, %v790
    %v794 = vlaneseq
    %v795 = vshrl.u32 %v794, 7
    %v796 = vsub.s32 1, %v795
    %v797 = vrot.slane %v787, %v796
    %v798 = vlaneseq
    %v799 = vshrl.u32 %v798, 7
    %v800 = vsub.s32 1, %v799
    %v801 = vrot.slane %v791, %v800
    %v802 = vmul.f32 %v749, %v797
    %v803 = vmul.f32 %v750, %v801
    %v804 = vadd.f32 %v802, %v803
    %805 = vadd.xlane.f32.xlu0 %v804
    %v806 = vpop.xlane.xlu0 %805
    %v807 = vadd.f32 %v806, %v781
    %vm808 = vcmask 7168
    %809 = vst.msk [vmem:[%s9] sm:$0xff] %vm808, %v783
    %811 = vrot.lane.b32.xlu0 %v807, 127
    %v812 = vpop.permute.xlu0 %811
    %814 = vst.msk [vmem:[%s10] sm:$0xff] %vm808, %v812
    // Predicated region
    $region54: #{tpu_custom_call.1} parent=1 // pred_check
      _
    $region55: #{tpu_custom_call.1} parent=1 // pred_check_branch
      %816 = sbr.rel (0) target = $region57
    $region56: #{tpu_custom_call.1} parent=1 // pred_region
      _
    $region57: #{tpu_custom_call.1} parent=1 // pred_fallthru
      _
    // Predicated region
    $region58: #{tpu_custom_call.1} parent=1 // pred_check
      _
    $region59: #{tpu_custom_call.1} parent=1 // pred_check_branch
      %818 = sbr.rel (0) target = $region61
    $region60: #{tpu_custom_call.1} parent=1 // pred_region
      _
    $region61: #{tpu_custom_call.1} parent=1 // pred_fallthru
      _
    // Predicated region
    $region62: #{tpu_custom_call.1} parent=1 // pred_check
      _
    $region63: #{tpu_custom_call.1} parent=1 // pred_check_branch
      %820 = sbr.rel (0) target = $region65
    $region64: #{tpu_custom_call.1} parent=1 // pred_region
      _
    $region65: #{tpu_custom_call.1} parent=1 // pred_fallthru
      _
    // Predicated region
    $region66: #{tpu_custom_call.1} parent=1 // pred_check
      _
    $region67: #{tpu_custom_call.1} parent=1 // pred_check_branch
      %822 = sbr.rel (0) target = $region69
    $region68: #{tpu_custom_call.1} parent=1 // pred_region
      _
    $region69: #{tpu_custom_call.1} parent=1 // pred_fallthru
      _
    %823 = vsyncpa [#allocation3], 1
    %824 = vsyncpa [#allocation5], 1
    %825 = vsyncpa [#allocation8], 1

</llo_original>
